<compile_context>
chip_gen: v7x
topology: tpu7x:2x2x1
jax: 0.10.0
libtpu: 0.0.40
codegen_flags: <defaults>
</compile_context>

<pallas_src>
import jax
import jax.numpy as jnp
from jax import lax
from jax.experimental import pallas as pl
from jax.experimental.pallas import tpu as pltpu


def _gather_kernel(ids_ref, emb_hbm, out_ref, row_buf, sem):
    """Gather one tile of embedding rows from HBM.

    ids_ref : SMEM (T_padded,) int32   -- all token ids (scalar prefetch)
    emb_hbm : HBM  (V, Dp)     float32 -- embedding table (never copied whole)
    out_ref : VMEM (TT, Dp)    float32 -- output tile for this grid step
    row_buf : VMEM (TT, Dp)    float32 -- DMA landing buffer
    sem     : DMA semaphore, shape (1,)
    """
    tt, _ = row_buf.shape
    base = pl.program_id(0) * tt

    def issue(t, carry):
        row = ids_ref[base + t]
        pltpu.make_async_copy(
            emb_hbm.at[pl.ds(row, 1), :],      # (1, Dp) row in HBM
            row_buf.at[pl.ds(t, 1), :],        # (1, Dp) row in VMEM
            sem.at[0],
        ).start()
        return carry

    # Issue all row gathers for this tile (they proceed concurrently).
    lax.fori_loop(0, tt, issue, 0)

    def drain(t, carry):
        # Each wait consumes one row's worth of bytes on the shared semaphore
        # (descriptor shape matches the issued copies).
        pltpu.make_async_copy(
            emb_hbm.at[pl.ds(0, 1), :],
            row_buf.at[pl.ds(0, 1), :],
            sem.at[0],
        ).wait()
        return carry

    lax.fori_loop(0, tt, drain, 0)

    # Single lane-dense (TT, Dp) store into the pipelined output block.
    out_ref[...] = row_buf[...]


def glove_embedding_lookup(text, embed_matrix, *, token_tile=256):
    """Pallas equivalent of nnGlove.forward(text) == nn.Embedding(text).

    text         : (B, S) integer token ids
    embed_matrix : (V, D) float32 embedding table (rows 0/1 = oob/pad = 0)
    returns      : (B, S, D) float32
    """
    B, S = text.shape
    V, D = embed_matrix.shape
    dtype = embed_matrix.dtype

    # Lane-dense feature dim: pad D to a multiple of 128 (sliced off below).
    # NOTE: in a real model this padding would be done once at init time.
    Dp = pl.cdiv(D, 128) * 128
    emb = embed_matrix if Dp == D else jnp.pad(embed_matrix, ((0, 0), (0, Dp - D)))

    # Flatten tokens and pad to a multiple of token_tile with index 0 (the
    # all-zero oob row); padded rows are sliced off below.
    T = B * S
    Tp = pl.cdiv(T, token_tile) * token_tile
    ids = text.reshape(T).astype(jnp.int32)
    if Tp != T:
        ids = jnp.pad(ids, (0, Tp - T))

    out_flat = pl.pallas_call(
        _gather_kernel,
        out_shape=jax.ShapeDtypeStruct((Tp, Dp), dtype),
        grid_spec=pltpu.PrefetchScalarGridSpec(
            num_scalar_prefetch=1,                      # ids -> SMEM
            grid=(Tp // token_tile,),
            in_specs=[
                pl.BlockSpec(memory_space=pl.ANY),      # table stays in HBM
            ],
            out_specs=pl.BlockSpec((token_tile, Dp), lambda i, ids: (i, 0)),
            scratch_shapes=[
                pltpu.VMEM((token_tile, Dp), dtype),    # gather landing buffer
                pltpu.SemaphoreType.DMA((1,)),
            ],
        ),
        compiler_params=pltpu.CompilerParams(
            # Token axis is embarrassingly parallel; lets v7x shard it across
            # its 2 TensorCores (no-op on single-core v5e/v6e).
            dimension_semantics=("parallel",),
        ),
    )(ids, emb)

    return out_flat[:T, :D].reshape(B, S, D)


def build_embed_matrix(key, vocab_size, dim, oob_index=0, pad_index=1):
    """Deterministic stand-in for load_glove(): rows oob/pad zero, rest random."""
    emb = jax.random.normal(key, (vocab_size, dim), dtype=jnp.float32)
    emb = emb.at[oob_index].set(0.0)
    emb = emb.at[pad_index].set(0.0)
    return emb


if __name__ == "__main__":
    key = jax.random.PRNGKey(0)
    k_emb, k_txt = jax.random.split(key)

    # Small synthetic "glove" vocab: V = num_words + 2 (oob row 0, pad row 1).
    V, D = 64, 32          # glove dim (hidden) = 32
    B, S = 2, 8            # batch = 2, seq = 8

    embed_matrix = build_embed_matrix(k_emb, V, D, oob_index=0, pad_index=1)

    # Token ids in [0, V); sprinkle in oob (0) and pad (1) indices.
    text = jax.random.randint(k_txt, (B, S), 0, V, dtype=jnp.int32)
    text = text.at[0, 0].set(0)   # oob
    text = text.at[1, -1].set(1)  # pad

    out = glove_embedding_lookup(text, embed_matrix, token_tile=256)
    out = jax.block_until_ready(out)

    # Reference: plain embedding gather (== torch nn.Embedding forward).
    ref = jnp.take(embed_matrix, text, axis=0)
    assert out.shape == (B, S, D)
    assert jnp.allclose(out, ref, atol=1e-6), "mismatch vs. reference gather"

    print("KERNEL_OK")
</pallas_src>

<mosaic_0001>
module attributes {stable_mosaic.version = 11 : i64} {
  func.func @_gather_kernel(%arg0: i32, %arg1: memref<256xi32, #tpu.memory_space<smem>>, %arg2: memref<64x128xf32, #tpu.memory_space<any>>, %arg3: memref<256x128xf32, #tpu.memory_space<vmem>>, %arg4: memref<256x128xf32, #tpu.memory_space<vmem>>, %arg5: memref<1x!tpu.dma_semaphore, #tpu.memory_space<semaphore_mem>>) attributes {dimension_semantics = [#tpu.dimension_semantics<parallel>], iteration_bounds = array<i64: 1>, scalar_prefetch = 1 : i64, scratch_operands = 2 : i64, tpu.core_type = #tpu.core_type<tc>, window_params = [{}, {transform_indices = @transform_1, window_bounds = array<i64: 256, 128>}]} {
    %c256_i32 = arith.constant 256 : i32
    %0 = arith.muli %arg0, %c256_i32 : i32
    %c0_i32 = arith.constant 0 : i32
    %c256_i32_0 = arith.constant 256 : i32
    %1 = arith.addi %c0_i32, %c256_i32_0 : i32
    %c1_i32 = arith.constant 1 : i32
    scf.for %arg6 = %c0_i32 to %1 step %c1_i32  : i32 {
      %5 = arith.addi %0, %arg6 : i32
      %6 = arith.index_cast %5 : i32 to index
      %7 = memref.load %arg1[%6] : memref<256xi32, #tpu.memory_space<smem>>
      %c0_i32_8 = arith.constant 0 : i32
      %c0_i32_9 = arith.constant 0 : i32
      %8 = tpu.memref_slice %arg2[%7, %c0_i32_9] : memref<64x128xf32, #tpu.memory_space<any>> -> memref<1x128xf32, #tpu.memory_space<any>>
      %c0_i32_10 = arith.constant 0 : i32
      %9 = tpu.memref_slice %arg4[%arg6, %c0_i32_10] : memref<256x128xf32, #tpu.memory_space<vmem>> -> memref<1x128xf32, #tpu.memory_space<vmem>>
      %10 = tpu.memref_slice %arg5[%c0_i32_8] : memref<1x!tpu.dma_semaphore, #tpu.memory_space<semaphore_mem>> -> memref<1x!tpu.dma_semaphore, #tpu.memory_space<semaphore_mem>>
      %11 = tpu.memref_squeeze %10 : memref<1x!tpu.dma_semaphore, #tpu.memory_space<semaphore_mem>> -> memref<!tpu.dma_semaphore, #tpu.memory_space<semaphore_mem>>
      tpu.enqueue_dma source(%8 : memref<1x128xf32, #tpu.memory_space<any>>) target(%9 : memref<1x128xf32, #tpu.memory_space<vmem>>) target_semaphore(%11 : memref<!tpu.dma_semaphore, #tpu.memory_space<semaphore_mem>>)
    }
    %c256_i32_1 = arith.constant 256 : i32
    %c0_i32_2 = arith.constant 0 : i32
    %c256_i32_3 = arith.constant 256 : i32
    %2 = arith.addi %c0_i32_2, %c256_i32_3 : i32
    %c1_i32_4 = arith.constant 1 : i32
    scf.for %arg6 = %c0_i32_2 to %2 step %c1_i32_4  : i32 {
      %c0_i32_8 = arith.constant 0 : i32
      %c0_i32_9 = arith.constant 0 : i32
      %c0_i32_10 = arith.constant 0 : i32
      %5 = tpu.memref_slice %arg2[%c0_i32_9, %c0_i32_10] : memref<64x128xf32, #tpu.memory_space<any>> -> memref<1x128xf32, #tpu.memory_space<any>>
      %c0_i32_11 = arith.constant 0 : i32
      %c0_i32_12 = arith.constant 0 : i32
      %6 = tpu.memref_slice %arg4[%c0_i32_11, %c0_i32_12] : memref<256x128xf32, #tpu.memory_space<vmem>> -> memref<1x128xf32, #tpu.memory_space<vmem>>
      %7 = tpu.memref_slice %arg5[%c0_i32_8] : memref<1x!tpu.dma_semaphore, #tpu.memory_space<semaphore_mem>> -> memref<1x!tpu.dma_semaphore, #tpu.memory_space<semaphore_mem>>
      %8 = tpu.memref_squeeze %7 : memref<1x!tpu.dma_semaphore, #tpu.memory_space<semaphore_mem>> -> memref<!tpu.dma_semaphore, #tpu.memory_space<semaphore_mem>>
      tpu.wait_dma2 semaphore(%8 : memref<!tpu.dma_semaphore, #tpu.memory_space<semaphore_mem>>) src(%5 : memref<1x128xf32, #tpu.memory_space<any>>) dst(%6 : memref<1x128xf32, #tpu.memory_space<vmem>>)
    }
    %c0 = arith.constant 0 : index
    %c0_5 = arith.constant 0 : index
    %3 = vector.load %arg4[%c0, %c0_5] : memref<256x128xf32, #tpu.memory_space<vmem>>, vector<256x128xf32>
    %c0_6 = arith.constant 0 : index
    %c0_7 = arith.constant 0 : index
    %4 = vector.load %arg3[%c0_6, %c0_7] : memref<256x128xf32, #tpu.memory_space<vmem>>, vector<256x128xf32>
    tpu.vector_store %arg3[%c0_6, %c0_7], %3 {strides = array<i32>} : memref<256x128xf32, #tpu.memory_space<vmem>>, vector<256x128xf32>,
    return
  }
  func.func @transform_1(%arg0: i32, %arg1: memref<256xi32, #tpu.memory_space<smem>>) -> (i32, i32) {
    %c0_i32 = arith.constant 0 : i32
    %c0_i32_0 = arith.constant 0 : i32
    return %arg0, %c0_i32 : i32, i32
  }
}

</mosaic_0001>

<llo_original>
// kernel: tpu_custom_call.1
$region0: #{tpu_custom_call.1}
  #allocation0 [shape = 'u32[]', space=smem, size = 0x4, offset = 0x4, fixed_abs, tag = 'smem constant byte address 0x4 - core index']
  #allocation1 [shape = 'u32[144,128]{1,0:T(1,128)}', space=vmem, size = 0x12000, scoped, tag = 'internal scratch']
  #allocation2 [shape = 'f32[256,128]{1,0:T(8,128)}', space=vmem, size = 0x20000, scoped, tag = 'scratch operand']
  #allocation3 [shape = 's32[1]{0}', space=sflag, size = 0x4, scoped, tag = 'scratch operand']
  #allocation4 [shape = 's32[1]{0}', space=sflag, size = 0x4, scoped, tag = 'scoped memory for tpu_custom_call.1']
  #allocation5 [shape = 'u8[1024]{0}', space=smem, size = 0x400, scoped, tag = 'prefetched SMEM operand 0']
  #allocation8 [shape = 's32[]', space=sflag, size = 0x4, offset = 0, fixed_abs, tag = 'sflag constant byte address 0x0 - dummy sync flag']
  #allocation9 [shape = 's32[]', space=sflag, size = 0x4, offset = 0, fixed_abs, tag = 'sflag constant byte address 0x0 - dummy sync flag']
  #allocation10 [shape = 'u32[]', space=smem, size = 0x4, offset = 0x44, fixed_abs, tag = 'smem constant byte address 0x44 - assertion arg 0']
  #allocation11 [shape = 'u32[]', space=smem, size = 0x4, offset = 0x48, fixed_abs, tag = 'smem constant byte address 0x48 - assertion arg 1']
  %s0 = inlined_call_operand.hbm [shape: s32[256], index: 0, kind: input, shape index: {}]
  %s1 = inlined_call_operand.hbm [shape: f32[64,128], index: 1, kind: input, shape index: {}]
  %s2 = inlined_call_operand.hbm [shape: f32[256,128], index: 2, kind: output, shape index: {}]
  %s3 = sld [smem:[#allocation0]]
  $region28: #{tpu_custom_call.1} parent=0
    _
  %s5 = ssub.s32 1, %s3
  %s6 = scalar_select 0, %s5, %s3
  %8 = dma.hbm_to_smem %s0, 32, [#allocation5], [#allocation4]
  %9 = dma.done [#allocation4], 32
  %10 = sfence
  $region1: #{tpu_custom_call.1} parent=0
    #allocation6 [shape = 'u8[131072]{0}', space=vmem, size = 0x20000, scoped, tag = 'output window, operand 0, single buffered']
    #allocation7 [shape = 's32[1]{0}', space=sflag, size = 0x4, scoped, tag = 'scoped memory for tpu_custom_call.1']
    %11 = vsyncpa [#allocation7], 0
    %s12 = smul.u32 0, 256
    loop: start=0, step=1, limit=256
    $region2: #{tpu_custom_call.1} parent=1 // loop_pre_header
      _
    $region3: #{tpu_custom_call.1} parent=1 // loop_header
      %s14 = sphi 0, %s18
      %p15 = scmp.ge.s32.totalorder %s14, 256
    $region4: #{tpu_custom_call.1} parent=1 // loop_header_branch
      %17 = sbr.rel (%p15) target = $region8
    $region5: #{tpu_custom_call.1} parent=1 // loop_body
      %s19 = sadd.s32 %s12, %s14
      %s20 = sld [smem:[#allocation5 + %s19]]
      %s21 = smul.addr %s20, 16
      %s22 = scalar_lea.hbm %s1, %s21
      %s23 = scalar_lea.vmem [#allocation2], %s14
      // Predicated region
      $region9: #{tpu_custom_call.1} parent=5 // pred_check
        _
      $region10: #{tpu_custom_call.1} parent=5 // pred_check_branch
        %25 = sbr.rel target = $region12
      $region11: #{tpu_custom_call.1} parent=5 // pred_region
        %26 = sst [smem:[#allocation10]] [#allocation9]
        %27 = sst [smem:[#allocation11]] [#allocation8]
      $region12: #{tpu_custom_call.1} parent=5 // pred_fallthru
        _
      %29 = shalt.err (0)
      %s31 = sshll.u32 %s23, 4
      %s32 = int_to_ptr.vmem [resolvable:$true] %s31
      %34 = dma.hbm_to_vmem [thread:$0]  %s22, 16, %s32, [#allocation3]
    $region6: #{tpu_custom_call.1} parent=1 // loop_footer
      %s18 = sadd.s32 1, %s14
    $region7: #{tpu_custom_call.1} parent=1 // loop_footer_branch
      %13 = sbr.rel target = $region3
    $region8: #{tpu_custom_call.1} parent=1 // loop_exit
      _
    loop: start=0, step=1, limit=256
    $region13: #{tpu_custom_call.1} parent=1 // loop_pre_header
      _
    $region14: #{tpu_custom_call.1} parent=1 // loop_header
      %s36 = sphi 0, %s40
      %p37 = scmp.ge.s32.totalorder %s36, 256
    $region15: #{tpu_custom_call.1} parent=1 // loop_header_branch
      %39 = sbr.rel (%p37) target = $region19
    $region16: #{tpu_custom_call.1} parent=1 // loop_body
      %s41 = smul.u32 1, 1
      %s42 = sshll.u32 %s41, 4
      %43 = dma.done [#allocation3], %s42
    $region17: #{tpu_custom_call.1} parent=1 // loop_footer
      %s40 = sadd.s32 1, %s36
    $region18: #{tpu_custom_call.1} parent=1 // loop_footer_branch
      %35 = sbr.rel target = $region14
    $region19: #{tpu_custom_call.1} parent=1 // loop_exit
      _
    %v44 = vld [vmem:[#allocation2] sm:$0xff]
    %v45 = vld [vmem:[#allocation2 + $0x8] sm:$0xff]
    %v46 = vld [vmem:[#allocation2 + $0x10] sm:$0xff]
    %v47 = vld [vmem:[#allocation2 + $0x18] sm:$0xff]
    %v48 = vld [vmem:[#allocation2 + $0x20] sm:$0xff]
    %v49 = vld [vmem:[#allocation2 + $0x28] sm:$0xff]
    %v50 = vld [vmem:[#allocation2 + $0x30] sm:$0xff]
    %v51 = vld [vmem:[#allocation2 + $0x38] sm:$0xff]
    %v52 = vld [vmem:[#allocation2 + $0x40] sm:$0xff]
    %v53 = vld [vmem:[#allocation2 + $0x48] sm:$0xff]
    %v54 = vld [vmem:[#allocation2 + $0x50] sm:$0xff]
    %v55 = vld [vmem:[#allocation2 + $0x58] sm:$0xff]
    %v56 = vld [vmem:[#allocation2 + $0x60] sm:$0xff]
    %v57 = vld [vmem:[#allocation2 + $0x68] sm:$0xff]
    %v58 = vld [vmem:[#allocation2 + $0x70] sm:$0xff]
    %v59 = vld [vmem:[#allocation2 + $0x78] sm:$0xff]
    %v60 = vld [vmem:[#allocation2 + $0x80] sm:$0xff]
    %v61 = vld [vmem:[#allocation2 + $0x88] sm:$0xff]
    %v62 = vld [vmem:[#allocation2 + $0x90] sm:$0xff]
    %v63 = vld [vmem:[#allocation2 + $0x98] sm:$0xff]
    %v64 = vld [vmem:[#allocation2 + $0xa0] sm:$0xff]
    %v65 = vld [vmem:[#allocation2 + $0xa8] sm:$0xff]
    %v66 = vld [vmem:[#allocation2 + $0xb0] sm:$0xff]
    %v67 = vld [vmem:[#allocation2 + $0xb8] sm:$0xff]
    %v68 = vld [vmem:[#allocation2 + $0xc0] sm:$0xff]
    %v69 = vld [vmem:[#allocation2 + $0xc8] sm:$0xff]
    %v70 = vld [vmem:[#allocation2 + $0xd0] sm:$0xff]
    %v71 = vld [vmem:[#allocation2 + $0xd8] sm:$0xff]
    %v72 = vld [vmem:[#allocation2 + $0xe0] sm:$0xff]
    %v73 = vld [vmem:[#allocation2 + $0xe8] sm:$0xff]
    %v74 = vld [vmem:[#allocation2 + $0xf0] sm:$0xff]
    %v75 = vld [vmem:[#allocation2 + $0xf8] sm:$0xff]
    %76 = vst [vmem:[#allocation6] sm:$0xff] %v44
    %77 = vst [vmem:[#allocation6 + $0x8] sm:$0xff] %v45
    %78 = vst [vmem:[#allocation6 + $0x10] sm:$0xff] %v46
    %79 = vst [vmem:[#allocation6 + $0x18] sm:$0xff] %v47
    %80 = vst [vmem:[#allocation6 + $0x20] sm:$0xff] %v48
    %81 = vst [vmem:[#allocation6 + $0x28] sm:$0xff] %v49
    %82 = vst [vmem:[#allocation6 + $0x30] sm:$0xff] %v50
    %83 = vst [vmem:[#allocation6 + $0x38] sm:$0xff] %v51
    %84 = vst [vmem:[#allocation6 + $0x40] sm:$0xff] %v52
    %85 = vst [vmem:[#allocation6 + $0x48] sm:$0xff] %v53
    %86 = vst [vmem:[#allocation6 + $0x50] sm:$0xff] %v54
    %87 = vst [vmem:[#allocation6 + $0x58] sm:$0xff] %v55
    %88 = vst [vmem:[#allocation6 + $0x60] sm:$0xff] %v56
    %89 = vst [vmem:[#allocation6 + $0x68] sm:$0xff] %v57
    %90 = vst [vmem:[#allocation6 + $0x70] sm:$0xff] %v58
    %91 = vst [vmem:[#allocation6 + $0x78] sm:$0xff] %v59
    %92 = vst [vmem:[#allocation6 + $0x80] sm:$0xff] %v60
    %93 = vst [vmem:[#allocation6 + $0x88] sm:$0xff] %v61
    %94 = vst [vmem:[#allocation6 + $0x90] sm:$0xff] %v62
    %95 = vst [vmem:[#allocation6 + $0x98] sm:$0xff] %v63
    %96 = vst [vmem:[#allocation6 + $0xa0] sm:$0xff] %v64
    %97 = vst [vmem:[#allocation6 + $0xa8] sm:$0xff] %v65
    %98 = vst [vmem:[#allocation6 + $0xb0] sm:$0xff] %v66
    %99 = vst [vmem:[#allocation6 + $0xb8] sm:$0xff] %v67
    %100 = vst [vmem:[#allocation6 + $0xc0] sm:$0xff] %v68
    %101 = vst [vmem:[#allocation6 + $0xc8] sm:$0xff] %v69
    %102 = vst [vmem:[#allocation6 + $0xd0] sm:$0xff] %v70
    %103 = vst [vmem:[#allocation6 + $0xd8] sm:$0xff] %v71
    %104 = vst [vmem:[#allocation6 + $0xe0] sm:$0xff] %v72
    %105 = vst [vmem:[#allocation6 + $0xe8] sm:$0xff] %v73
    %106 = vst [vmem:[#allocation6 + $0xf0] sm:$0xff] %v74
    %107 = vst [vmem:[#allocation6 + $0xf8] sm:$0xff] %v75
    // Predicated region
    $region20: #{tpu_custom_call.1} parent=1 // pred_check
      _
    $region21: #{tpu_custom_call.1} parent=1 // pred_check_branch
      %109 = sbr.rel (0) target = $region23
    $region22: #{tpu_custom_call.1} parent=1 // pred_region
      %s111 = ssub.s32 4096, 4096
      %112 = vsyncadd [#allocation7], %s111
      %s113 = sshll.u32 [#allocation6], 4
      %s114 = int_to_ptr.vmem [resolvable:$true] %s113
      %119 = dma.vmem_to_hbm [thread:$0]  %s114, 4096, %s2, [#allocation7], 128, 128, 8
    $region23: #{tpu_custom_call.1} parent=1 // pred_fallthru
      _
    // Predicated region
    $region24: #{tpu_custom_call.1} parent=1 // pred_check
      _
    $region25: #{tpu_custom_call.1} parent=1 // pred_check_branch
      %121 = sbr.rel (0) target = $region27
    $region26: #{tpu_custom_call.1} parent=1 // pred_region
      %122 = dma.done [#allocation7], 4096
    $region27: #{tpu_custom_call.1} parent=1 // pred_fallthru
      _
    %123 = vsyncpa [#allocation7], 1
  %124 = vsyncmov [#allocation3]
  %s125 = vpop.sfrf %124
  %p126 = scmp.eq.s32.totalorder %s125, 0
  %p127 = pneg %p126
  %129 = shalt.err (%p127)

</llo_original>
